<compile_context>
chip_gen: v6e
topology: v6e:2x2x1
jax: 0.10.0
libtpu: 0.0.40
codegen_flags: <defaults>
</compile_context>

<pallas_src>
import numpy as np
import jax
import jax.numpy as jnp
from jax.experimental import pallas as pl
from jax.experimental.pallas import tpu as pltpu  # noqa: F401  (TPU backend assumed)


def _lstm_onestep_kernel(x_ref, h_ref, c_ref, wx0_ref, wxr_ref, wh_ref, b_ref,
                         hc_out_ref):
    """Single-invocation kernel: all LSTM layers of one time step.

    Shapes (all float32, fully VMEM-resident):
      x_ref      : (B, num_inputs)        external input of this time step
      h_ref      : (L, B, H)              previous hidden state (all layers)
      c_ref      : (L, B, H)              previous cell state (all layers)
      wx0_ref    : (num_inputs, 4H)       layer-0 input->gates weights
      wxr_ref    : (max(L-1,1), H, 4H)    layer>=1 input->gates weights
      wh_ref     : (L, H, 4H)             hidden->gates weights
      b_ref      : (L, 1, 4H)             fused bias (b_ih + b_hh)
      hc_out_ref : (L, 2, B, H)           [:,0] = h_new, [:,1] = c_new
    Gate order along 4H follows PyTorch LSTM: i, f, g, o.
    """
    L, B, H = h_ref.shape

    x = x_ref[...]                              # layer-0 input, kept in vregs
    for l in range(L):                          # statically unrolled (L small)
        w_in = wx0_ref[...] if l == 0 else wxr_ref[l - 1]

        # Two MXU pushes per layer; output width 4H (=128 for H=32) is
        # lane-dense.  f32 accumulate.
        gates = (jnp.dot(x, w_in, preferred_element_type=jnp.float32)
                 + jnp.dot(h_ref[l], wh_ref[l],
                           preferred_element_type=jnp.float32)
                 + b_ref[l])                    # (B, 4H)

        # Whole-block activations: one sigmoid + one tanh pass over (B, 4H),
        # the tanh result selected on the g-gate lanes via an iota mask.
        lane = jax.lax.broadcasted_iota(jnp.int32, gates.shape, 1)
        is_g = (lane >= 2 * H) & (lane < 3 * H)
        act = jnp.where(is_g, jnp.tanh(gates), jax.nn.sigmoid(gates))

        i_g = act[:, 0 * H:1 * H]
        f_g = act[:, 1 * H:2 * H]
        g_g = act[:, 2 * H:3 * H]
        o_g = act[:, 3 * H:4 * H]

        c_new = f_g * c_ref[l] + i_g * g_g
        h_new = o_g * jnp.tanh(c_new)

        hc_out_ref[l, 0] = h_new
        hc_out_ref[l, 1] = c_new

        x = h_new                               # next layer's input (vreg carry)


def lstm_single_step(x, h_prev, c_prev, wx0, wxr, wh, b):
    """All num_layers LSTM layers of one time step in a single pallas_call."""
    L, B, H = h_prev.shape
    D = x.shape[1]
    G = 4 * H

    flops = 2 * B * (D * G + (L - 1) * H * G + L * H * G)
    transcendentals = L * B * 9 * H                      # 2 full 4H passes + tanh(c)
    bytes_accessed = 4 * (x.size + h_prev.size + c_prev.size + wx0.size
                          + wxr.size + wh.size + b.size + L * 2 * B * H)

    hc = pl.pallas_call(
        _lstm_onestep_kernel,
        out_shape=jax.ShapeDtypeStruct((L, 2, B, H), jnp.float32),
        cost_estimate=pl.CostEstimate(
            flops=int(flops),
            transcendentals=int(transcendentals),
            bytes_accessed=int(bytes_accessed)),
    )(x, h_prev, c_prev, wx0, wxr, wh, b)

    return hc[:, 0], hc[:, 1]


class Controller:
    """JAX/Pallas port of the DNC controller (multi-layer LSTM, one step per call)."""

    def __init__(self, num_inputs, num_outputs, num_layers, key):
        self.num_inputs = num_inputs
        self.num_outputs = num_outputs
        self.num_layers = num_layers

        H, L = num_outputs, num_layers
        stdev = 5.0 / np.sqrt(num_inputs + num_outputs)
        keys = jax.random.split(key, 2 * L + 2)

        # PyTorch init: weights U(-stdev, stdev), biases 0.
        self.wx0 = jax.random.uniform(keys[0], (num_inputs, 4 * H), jnp.float32,
                                      -stdev, stdev)
        if L > 1:
            self.wxr = jnp.stack([
                jax.random.uniform(keys[2 * l], (H, 4 * H), jnp.float32,
                                   -stdev, stdev)
                for l in range(1, L)])
        else:
            self.wxr = jnp.zeros((1, H, 4 * H), jnp.float32)   # unused dummy
        self.wh = jnp.stack([
            jax.random.uniform(keys[2 * l + 1], (H, 4 * H), jnp.float32,
                               -stdev, stdev)
            for l in range(L)])
        self.b = jnp.zeros((L, 1, 4 * H), jnp.float32)          # b_ih + b_hh

        # h_init / c_init: randn * 0.05, shape (L, 1, H)
        self.h_init = 0.05 * jax.random.normal(keys[2 * L], (L, 1, H), jnp.float32)
        self.c_init = 0.05 * jax.random.normal(keys[2 * L + 1], (L, 1, H), jnp.float32)

    def create_hidden_state(self, batch_size):
        h = jnp.tile(self.h_init, (1, batch_size, 1))
        c = jnp.tile(self.c_init, (1, batch_size, 1))
        return (h, c)

    def network_size(self):
        return (self.num_inputs, self.num_outputs)

    def forward(self, inp, prev_state):
        """inp: (B, num_inputs); prev_state: ((L,B,H), (L,B,H))."""
        h_prev, c_prev = prev_state
        h_new, c_new = lstm_single_step(inp, h_prev, c_prev,
                                        self.wx0, self.wxr, self.wh, self.b)
        # Single time step: LSTM output == top layer's new hidden state.
        return h_new[-1], (h_new, c_new)

    # Pure-JAX reference of the identical math (sanity check).
    def forward_ref(self, inp, prev_state):
        h_prev, c_prev = prev_state
        H = self.num_outputs
        x = inp
        hs, cs = [], []
        for l in range(self.num_layers):
            wx = self.wx0 if l == 0 else self.wxr[l - 1]
            gates = x @ wx + h_prev[l] @ self.wh[l] + self.b[l]
            i = jax.nn.sigmoid(gates[:, 0 * H:1 * H])
            f = jax.nn.sigmoid(gates[:, 1 * H:2 * H])
            g = jnp.tanh(gates[:, 2 * H:3 * H])
            o = jax.nn.sigmoid(gates[:, 3 * H:4 * H])
            c_new = f * c_prev[l] + i * g
            h_new = o * jnp.tanh(c_new)
            hs.append(h_new)
            cs.append(c_new)
            x = h_new
        return hs[-1], (jnp.stack(hs), jnp.stack(cs))


if __name__ == "__main__":
    num_inputs, num_outputs, num_layers = 48, 32, 3
    batch = 4

    key = jax.random.PRNGKey(0)
    k_params, k_inp = jax.random.split(key)

    ctrl = Controller(num_inputs, num_outputs, num_layers, k_params)

    inp = jax.random.normal(k_inp, (batch, num_inputs), jnp.float32)
    prev_state = ctrl.create_hidden_state(batch)

    out, (h_new, c_new) = ctrl.forward(inp, prev_state)
    out = jax.block_until_ready(out)
    h_new = jax.block_until_ready(h_new)
    c_new = jax.block_until_ready(c_new)

    # Sanity check against plain-JAX reference of identical math.
    out_ref, (h_ref, c_ref) = ctrl.forward_ref(inp, prev_state)
    assert out.shape == (batch, num_outputs)
    assert h_new.shape == (num_layers, batch, num_outputs)
    assert c_new.shape == (num_layers, batch, num_outputs)
    np.testing.assert_allclose(np.asarray(out), np.asarray(out_ref), atol=1e-5, rtol=1e-5)
    np.testing.assert_allclose(np.asarray(h_new), np.asarray(h_ref), atol=1e-5, rtol=1e-5)
    np.testing.assert_allclose(np.asarray(c_new), np.asarray(c_ref), atol=1e-5, rtol=1e-5)

    print("KERNEL_OK")
</pallas_src>

<mosaic_0001>
module attributes {stable_mosaic.version = 11 : i64} {
  func.func @_lstm_onestep_kernel(%arg0: memref<4x48xf32, #tpu.memory_space<vmem>>, %arg1: memref<3x4x32xf32, #tpu.memory_space<vmem>>, %arg2: memref<3x4x32xf32, #tpu.memory_space<vmem>>, %arg3: memref<48x128xf32, #tpu.memory_space<vmem>>, %arg4: memref<2x32x128xf32, #tpu.memory_space<vmem>>, %arg5: memref<3x32x128xf32, #tpu.memory_space<vmem>>, %arg6: memref<3x1x128xf32, #tpu.memory_space<vmem>>, %arg7: memref<3x2x4x32xf32, #tpu.memory_space<vmem>>) attributes {dimension_semantics = [], scalar_prefetch = 0 : i64, scratch_operands = 0 : i64, tpu.core_type = #tpu.core_type<tc>} {
    %c0 = arith.constant 0 : index
    %c0_0 = arith.constant 0 : index
    %0 = vector.load %arg0[%c0, %c0_0] : memref<4x48xf32, #tpu.memory_space<vmem>>, vector<4x48xf32>
    %c0_1 = arith.constant 0 : index
    %c0_2 = arith.constant 0 : index
    %1 = vector.load %arg3[%c0_1, %c0_2] : memref<48x128xf32, #tpu.memory_space<vmem>>, vector<48x128xf32>
    %cst = arith.constant dense<0.000000e+00> : vector<4x128xf32>
    %2 = tpu.matmul %0, %1, %cst {dimension_numbers = #tpu.dot_dimension_numbers<[1], [0], [0], [1], [0, 0, 1, 1], [], []>} : vector<4x48xf32>, vector<48x128xf32>, vector<4x128xf32> -> vector<4x128xf32>
    %c0_3 = arith.constant 0 : index
    %c0_4 = arith.constant 0 : index
    %c0_5 = arith.constant 0 : index
    %3 = vector.load %arg1[%c0_3, %c0_4, %c0_5] : memref<3x4x32xf32, #tpu.memory_space<vmem>>, vector<1x4x32xf32>
    %4 = vector.shape_cast %3 : vector<1x4x32xf32> to vector<4x32xf32>
    %c0_6 = arith.constant 0 : index
    %c0_7 = arith.constant 0 : index
    %c0_8 = arith.constant 0 : index
    %5 = vector.load %arg5[%c0_6, %c0_7, %c0_8] : memref<3x32x128xf32, #tpu.memory_space<vmem>>, vector<1x32x128xf32>
    %6 = vector.shape_cast %5 : vector<1x32x128xf32> to vector<32x128xf32>
    %cst_9 = arith.constant dense<0.000000e+00> : vector<4x128xf32>
    %7 = tpu.matmul %4, %6, %cst_9 {dimension_numbers = #tpu.dot_dimension_numbers<[1], [0], [0], [1], [0, 0, 1, 1], [], []>} : vector<4x32xf32>, vector<32x128xf32>, vector<4x128xf32> -> vector<4x128xf32>
    %8 = arith.addf %2, %7 : vector<4x128xf32>
    %c0_10 = arith.constant 0 : index
    %c0_11 = arith.constant 0 : index
    %c0_12 = arith.constant 0 : index
    %9 = vector.load %arg6[%c0_10, %c0_11, %c0_12] : memref<3x1x128xf32, #tpu.memory_space<vmem>>, vector<1x1x128xf32>
    %10 = vector.shape_cast %9 : vector<1x1x128xf32> to vector<1x128xf32>
    %11 = vector.broadcast %10 : vector<1x128xf32> to vector<4x128xf32>
    %12 = arith.addf %8, %11 : vector<4x128xf32>
    %13 = tpu.iota {dimensions = array<i32: 1>} : vector<4x128xi32>
    %c64_i32 = arith.constant 64 : i32
    %14 = vector.broadcast %c64_i32 : i32 to vector<4x128xi32>
    %15 = arith.cmpi sge, %13, %14 : vector<4x128xi32>
    %c96_i32 = arith.constant 96 : i32
    %16 = vector.broadcast %c96_i32 : i32 to vector<4x128xi32>
    %17 = arith.cmpi slt, %13, %16 : vector<4x128xi32>
    %18 = arith.andi %15, %17 : vector<4x128xi1>
    %19 = math.tanh %12 : vector<4x128xf32>
    %20 = arith.negf %12 : vector<4x128xf32>
    %21 = math.exp %20 : vector<4x128xf32>
    %cst_13 = arith.constant 1.000000e+00 : f32
    %22 = vector.broadcast %cst_13 : f32 to vector<4x128xf32>
    %23 = arith.addf %22, %21 : vector<4x128xf32>
    %24 = arith.divf %22, %23 : vector<4x128xf32>
    %25 = arith.select %18, %19, %24 : vector<4x128xi1>, vector<4x128xf32>
    %26 = vector.extract_strided_slice %25 {offsets = [0, 0], sizes = [4, 32], strides = [1, 1]} : vector<4x128xf32> to vector<4x32xf32>
    %27 = vector.extract_strided_slice %25 {offsets = [0, 32], sizes = [4, 32], strides = [1, 1]} : vector<4x128xf32> to vector<4x32xf32>
    %28 = vector.extract_strided_slice %25 {offsets = [0, 64], sizes = [4, 32], strides = [1, 1]} : vector<4x128xf32> to vector<4x32xf32>
    %29 = vector.extract_strided_slice %25 {offsets = [0, 96], sizes = [4, 32], strides = [1, 1]} : vector<4x128xf32> to vector<4x32xf32>
    %c0_14 = arith.constant 0 : index
    %c0_15 = arith.constant 0 : index
    %c0_16 = arith.constant 0 : index
    %30 = vector.load %arg2[%c0_14, %c0_15, %c0_16] : memref<3x4x32xf32, #tpu.memory_space<vmem>>, vector<1x4x32xf32>
    %31 = vector.shape_cast %30 : vector<1x4x32xf32> to vector<4x32xf32>
    %32 = arith.mulf %27, %31 : vector<4x32xf32>
    %33 = arith.mulf %26, %28 : vector<4x32xf32>
    %34 = arith.addf %32, %33 : vector<4x32xf32>
    %35 = math.tanh %34 : vector<4x32xf32>
    %36 = arith.mulf %29, %35 : vector<4x32xf32>
    %c0_17 = arith.constant 0 : index
    %c0_18 = arith.constant 0 : index
    %c0_19 = arith.constant 0 : index
    %c0_20 = arith.constant 0 : index
    %37 = vector.load %arg7[%c0_17, %c0_18, %c0_19, %c0_20] : memref<3x2x4x32xf32, #tpu.memory_space<vmem>>, vector<1x1x4x32xf32>
    %38 = vector.shape_cast %37 : vector<1x1x4x32xf32> to vector<4x32xf32>
    %39 = vector.shape_cast %36 : vector<4x32xf32> to vector<1x1x4x32xf32>
    tpu.vector_store %arg7[%c0_17, %c0_18, %c0_19, %c0_20], %39 {strides = array<i32>} : memref<3x2x4x32xf32, #tpu.memory_space<vmem>>, vector<1x1x4x32xf32>,
    %c0_21 = arith.constant 0 : index
    %c1 = arith.constant 1 : index
    %c0_22 = arith.constant 0 : index
    %c0_23 = arith.constant 0 : index
    %40 = vector.load %arg7[%c0_21, %c1, %c0_22, %c0_23] : memref<3x2x4x32xf32, #tpu.memory_space<vmem>>, vector<1x1x4x32xf32>
    %41 = vector.shape_cast %40 : vector<1x1x4x32xf32> to vector<4x32xf32>
    %42 = vector.shape_cast %34 : vector<4x32xf32> to vector<1x1x4x32xf32>
    tpu.vector_store %arg7[%c0_21, %c1, %c0_22, %c0_23], %42 {strides = array<i32>} : memref<3x2x4x32xf32, #tpu.memory_space<vmem>>, vector<1x1x4x32xf32>,
    %c0_24 = arith.constant 0 : index
    %c0_25 = arith.constant 0 : index
    %c0_26 = arith.constant 0 : index
    %43 = vector.load %arg4[%c0_24, %c0_25, %c0_26] : memref<2x32x128xf32, #tpu.memory_space<vmem>>, vector<1x32x128xf32>
    %44 = vector.shape_cast %43 : vector<1x32x128xf32> to vector<32x128xf32>
    %cst_27 = arith.constant dense<0.000000e+00> : vector<4x128xf32>
    %45 = tpu.matmul %36, %44, %cst_27 {dimension_numbers = #tpu.dot_dimension_numbers<[1], [0], [0], [1], [0, 0, 1, 1], [], []>} : vector<4x32xf32>, vector<32x128xf32>, vector<4x128xf32> -> vector<4x128xf32>
    %c1_28 = arith.constant 1 : index
    %c0_29 = arith.constant 0 : index
    %c0_30 = arith.constant 0 : index
    %46 = vector.load %arg1[%c1_28, %c0_29, %c0_30] : memref<3x4x32xf32, #tpu.memory_space<vmem>>, vector<1x4x32xf32>
    %47 = vector.shape_cast %46 : vector<1x4x32xf32> to vector<4x32xf32>
    %c1_31 = arith.constant 1 : index
    %c0_32 = arith.constant 0 : index
    %c0_33 = arith.constant 0 : index
    %48 = vector.load %arg5[%c1_31, %c0_32, %c0_33] : memref<3x32x128xf32, #tpu.memory_space<vmem>>, vector<1x32x128xf32>
    %49 = vector.shape_cast %48 : vector<1x32x128xf32> to vector<32x128xf32>
    %cst_34 = arith.constant dense<0.000000e+00> : vector<4x128xf32>
    %50 = tpu.matmul %47, %49, %cst_34 {dimension_numbers = #tpu.dot_dimension_numbers<[1], [0], [0], [1], [0, 0, 1, 1], [], []>} : vector<4x32xf32>, vector<32x128xf32>, vector<4x128xf32> -> vector<4x128xf32>
    %51 = arith.addf %45, %50 : vector<4x128xf32>
    %c1_35 = arith.constant 1 : index
    %c0_36 = arith.constant 0 : index
    %c0_37 = arith.constant 0 : index
    %52 = vector.load %arg6[%c1_35, %c0_36, %c0_37] : memref<3x1x128xf32, #tpu.memory_space<vmem>>, vector<1x1x128xf32>
    %53 = vector.shape_cast %52 : vector<1x1x128xf32> to vector<1x128xf32>
    %54 = vector.broadcast %53 : vector<1x128xf32> to vector<4x128xf32>
    %55 = arith.addf %51, %54 : vector<4x128xf32>
    %56 = tpu.iota {dimensions = array<i32: 1>} : vector<4x128xi32>
    %c64_i32_38 = arith.constant 64 : i32
    %57 = vector.broadcast %c64_i32_38 : i32 to vector<4x128xi32>
    %58 = arith.cmpi sge, %56, %57 : vector<4x128xi32>
    %c96_i32_39 = arith.constant 96 : i32
    %59 = vector.broadcast %c96_i32_39 : i32 to vector<4x128xi32>
    %60 = arith.cmpi slt, %56, %59 : vector<4x128xi32>
    %61 = arith.andi %58, %60 : vector<4x128xi1>
    %62 = math.tanh %55 : vector<4x128xf32>
    %63 = arith.negf %55 : vector<4x128xf32>
    %64 = math.exp %63 : vector<4x128xf32>
    %cst_40 = arith.constant 1.000000e+00 : f32
    %65 = vector.broadcast %cst_40 : f32 to vector<4x128xf32>
    %66 = arith.addf %65, %64 : vector<4x128xf32>
    %67 = arith.divf %65, %66 : vector<4x128xf32>
    %68 = arith.select %61, %62, %67 : vector<4x128xi1>, vector<4x128xf32>
    %69 = vector.extract_strided_slice %68 {offsets = [0, 0], sizes = [4, 32], strides = [1, 1]} : vector<4x128xf32> to vector<4x32xf32>
    %70 = vector.extract_strided_slice %68 {offsets = [0, 32], sizes = [4, 32], strides = [1, 1]} : vector<4x128xf32> to vector<4x32xf32>
    %71 = vector.extract_strided_slice %68 {offsets = [0, 64], sizes = [4, 32], strides = [1, 1]} : vector<4x128xf32> to vector<4x32xf32>
    %72 = vector.extract_strided_slice %68 {offsets = [0, 96], sizes = [4, 32], strides = [1, 1]} : vector<4x128xf32> to vector<4x32xf32>
    %c1_41 = arith.constant 1 : index
    %c0_42 = arith.constant 0 : index
    %c0_43 = arith.constant 0 : index
    %73 = vector.load %arg2[%c1_41, %c0_42, %c0_43] : memref<3x4x32xf32, #tpu.memory_space<vmem>>, vector<1x4x32xf32>
    %74 = vector.shape_cast %73 : vector<1x4x32xf32> to vector<4x32xf32>
    %75 = arith.mulf %70, %74 : vector<4x32xf32>
    %76 = arith.mulf %69, %71 : vector<4x32xf32>
    %77 = arith.addf %75, %76 : vector<4x32xf32>
    %78 = math.tanh %77 : vector<4x32xf32>
    %79 = arith.mulf %72, %78 : vector<4x32xf32>
    %c1_44 = arith.constant 1 : index
    %c0_45 = arith.constant 0 : index
    %c0_46 = arith.constant 0 : index
    %c0_47 = arith.constant 0 : index
    %80 = vector.load %arg7[%c1_44, %c0_45, %c0_46, %c0_47] : memref<3x2x4x32xf32, #tpu.memory_space<vmem>>, vector<1x1x4x32xf32>
    %81 = vector.shape_cast %80 : vector<1x1x4x32xf32> to vector<4x32xf32>
    %82 = vector.shape_cast %79 : vector<4x32xf32> to vector<1x1x4x32xf32>
    tpu.vector_store %arg7[%c1_44, %c0_45, %c0_46, %c0_47], %82 {strides = array<i32>} : memref<3x2x4x32xf32, #tpu.memory_space<vmem>>, vector<1x1x4x32xf32>,
    %c1_48 = arith.constant 1 : index
    %c1_49 = arith.constant 1 : index
    %c0_50 = arith.constant 0 : index
    %c0_51 = arith.constant 0 : index
    %83 = vector.load %arg7[%c1_48, %c1_49, %c0_50, %c0_51] : memref<3x2x4x32xf32, #tpu.memory_space<vmem>>, vector<1x1x4x32xf32>
    %84 = vector.shape_cast %83 : vector<1x1x4x32xf32> to vector<4x32xf32>
    %85 = vector.shape_cast %77 : vector<4x32xf32> to vector<1x1x4x32xf32>
    tpu.vector_store %arg7[%c1_48, %c1_49, %c0_50, %c0_51], %85 {strides = array<i32>} : memref<3x2x4x32xf32, #tpu.memory_space<vmem>>, vector<1x1x4x32xf32>,
    %c1_52 = arith.constant 1 : index
    %c0_53 = arith.constant 0 : index
    %c0_54 = arith.constant 0 : index
    %86 = vector.load %arg4[%c1_52, %c0_53, %c0_54] : memref<2x32x128xf32, #tpu.memory_space<vmem>>, vector<1x32x128xf32>
    %87 = vector.shape_cast %86 : vector<1x32x128xf32> to vector<32x128xf32>
    %cst_55 = arith.constant dense<0.000000e+00> : vector<4x128xf32>
    %88 = tpu.matmul %79, %87, %cst_55 {dimension_numbers = #tpu.dot_dimension_numbers<[1], [0], [0], [1], [0, 0, 1, 1], [], []>} : vector<4x32xf32>, vector<32x128xf32>, vector<4x128xf32> -> vector<4x128xf32>
    %c2 = arith.constant 2 : index
    %c0_56 = arith.constant 0 : index
    %c0_57 = arith.constant 0 : index
    %89 = vector.load %arg1[%c2, %c0_56, %c0_57] : memref<3x4x32xf32, #tpu.memory_space<vmem>>, vector<1x4x32xf32>
    %90 = vector.shape_cast %89 : vector<1x4x32xf32> to vector<4x32xf32>
    %c2_58 = arith.constant 2 : index
    %c0_59 = arith.constant 0 : index
    %c0_60 = arith.constant 0 : index
    %91 = vector.load %arg5[%c2_58, %c0_59, %c0_60] : memref<3x32x128xf32, #tpu.memory_space<vmem>>, vector<1x32x128xf32>
    %92 = vector.shape_cast %91 : vector<1x32x128xf32> to vector<32x128xf32>
    %cst_61 = arith.constant dense<0.000000e+00> : vector<4x128xf32>
    %93 = tpu.matmul %90, %92, %cst_61 {dimension_numbers = #tpu.dot_dimension_numbers<[1], [0], [0], [1], [0, 0, 1, 1], [], []>} : vector<4x32xf32>, vector<32x128xf32>, vector<4x128xf32> -> vector<4x128xf32>
    %94 = arith.addf %88, %93 : vector<4x128xf32>
    %c2_62 = arith.constant 2 : index
    %c0_63 = arith.constant 0 : index
    %c0_64 = arith.constant 0 : index
    %95 = vector.load %arg6[%c2_62, %c0_63, %c0_64] : memref<3x1x128xf32, #tpu.memory_space<vmem>>, vector<1x1x128xf32>
    %96 = vector.shape_cast %95 : vector<1x1x128xf32> to vector<1x128xf32>
    %97 = vector.broadcast %96 : vector<1x128xf32> to vector<4x128xf32>
    %98 = arith.addf %94, %97 : vector<4x128xf32>
    %99 = tpu.iota {dimensions = array<i32: 1>} : vector<4x128xi32>
    %c64_i32_65 = arith.constant 64 : i32
    %100 = vector.broadcast %c64_i32_65 : i32 to vector<4x128xi32>
    %101 = arith.cmpi sge, %99, %100 : vector<4x128xi32>
    %c96_i32_66 = arith.constant 96 : i32
    %102 = vector.broadcast %c96_i32_66 : i32 to vector<4x128xi32>
    %103 = arith.cmpi slt, %99, %102 : vector<4x128xi32>
    %104 = arith.andi %101, %103 : vector<4x128xi1>
    %105 = math.tanh %98 : vector<4x128xf32>
    %106 = arith.negf %98 : vector<4x128xf32>
    %107 = math.exp %106 : vector<4x128xf32>
    %cst_67 = arith.constant 1.000000e+00 : f32
    %108 = vector.broadcast %cst_67 : f32 to vector<4x128xf32>
    %109 = arith.addf %108, %107 : vector<4x128xf32>
    %110 = arith.divf %108, %109 : vector<4x128xf32>
    %111 = arith.select %104, %105, %110 : vector<4x128xi1>, vector<4x128xf32>
    %112 = vector.extract_strided_slice %111 {offsets = [0, 0], sizes = [4, 32], strides = [1, 1]} : vector<4x128xf32> to vector<4x32xf32>
    %113 = vector.extract_strided_slice %111 {offsets = [0, 32], sizes = [4, 32], strides = [1, 1]} : vector<4x128xf32> to vector<4x32xf32>
    %114 = vector.extract_strided_slice %111 {offsets = [0, 64], sizes = [4, 32], strides = [1, 1]} : vector<4x128xf32> to vector<4x32xf32>
    %115 = vector.extract_strided_slice %111 {offsets = [0, 96], sizes = [4, 32], strides = [1, 1]} : vector<4x128xf32> to vector<4x32xf32>
    %c2_68 = arith.constant 2 : index
    %c0_69 = arith.constant 0 : index
    %c0_70 = arith.constant 0 : index
    %116 = vector.load %arg2[%c2_68, %c0_69, %c0_70] : memref<3x4x32xf32, #tpu.memory_space<vmem>>, vector<1x4x32xf32>
    %117 = vector.shape_cast %116 : vector<1x4x32xf32> to vector<4x32xf32>
    %118 = arith.mulf %113, %117 : vector<4x32xf32>
    %119 = arith.mulf %112, %114 : vector<4x32xf32>
    %120 = arith.addf %118, %119 : vector<4x32xf32>
    %121 = math.tanh %120 : vector<4x32xf32>
    %122 = arith.mulf %115, %121 : vector<4x32xf32>
    %c2_71 = arith.constant 2 : index
    %c0_72 = arith.constant 0 : index
    %c0_73 = arith.constant 0 : index
    %c0_74 = arith.constant 0 : index
    %123 = vector.load %arg7[%c2_71, %c0_72, %c0_73, %c0_74] : memref<3x2x4x32xf32, #tpu.memory_space<vmem>>, vector<1x1x4x32xf32>
    %124 = vector.shape_cast %123 : vector<1x1x4x32xf32> to vector<4x32xf32>
    %125 = vector.shape_cast %122 : vector<4x32xf32> to vector<1x1x4x32xf32>
    tpu.vector_store %arg7[%c2_71, %c0_72, %c0_73, %c0_74], %125 {strides = array<i32>} : memref<3x2x4x32xf32, #tpu.memory_space<vmem>>, vector<1x1x4x32xf32>,
    %c2_75 = arith.constant 2 : index
    %c1_76 = arith.constant 1 : index
    %c0_77 = arith.constant 0 : index
    %c0_78 = arith.constant 0 : index
    %126 = vector.load %arg7[%c2_75, %c1_76, %c0_77, %c0_78] : memref<3x2x4x32xf32, #tpu.memory_space<vmem>>, vector<1x1x4x32xf32>
    %127 = vector.shape_cast %126 : vector<1x1x4x32xf32> to vector<4x32xf32>
    %128 = vector.shape_cast %120 : vector<4x32xf32> to vector<1x1x4x32xf32>
    tpu.vector_store %arg7[%c2_75, %c1_76, %c0_77, %c0_78], %128 {strides = array<i32>} : memref<3x2x4x32xf32, #tpu.memory_space<vmem>>, vector<1x1x4x32xf32>,
    return
  }
}

</mosaic_0001>

<llo_original>
// kernel: tpu_custom_call.1
$region0: #{tpu_custom_call.1}
  #allocation0 [shape = 'u32[]', space=smem, size = 0x4, offset = 0x4, fixed_abs, tag = 'smem constant byte address 0x4 - core index']
  #allocation1 [shape = 'u32[144,128]{1,0:T(1,128)}', space=vmem, size = 0x12000, scoped, tag = 'internal scratch']
  %s0 = inlined_call_operand.hbm [shape: f32[4,48], index: 0, kind: input, shape index: {}]
  %s1 = inlined_call_operand.hbm [shape: f32[3,4,32], index: 1, kind: input, shape index: {}]
  %s2 = inlined_call_operand.hbm [shape: f32[3,4,32], index: 2, kind: input, shape index: {}]
  %s3 = inlined_call_operand.hbm [shape: f32[48,128], index: 3, kind: input, shape index: {}]
  %s4 = inlined_call_operand.hbm [shape: f32[2,32,128], index: 4, kind: input, shape index: {}]
  %s5 = inlined_call_operand.hbm [shape: f32[3,32,128], index: 5, kind: input, shape index: {}]
  %s6 = inlined_call_operand.vmem [shape: f32[3,1,128], index: 6, kind: input, shape index: {}]
  %s7 = inlined_call_operand.hbm [shape: f32[3,2,4,32], index: 7, kind: output, shape index: {}]
  %s8 = sld [smem:[#allocation0]]
  $region62: #{tpu_custom_call.1} parent=0
    _
  %s10 = ssub.s32 1, %s8
  %s11 = scalar_select 0, %s10, %s8
  $region1: #{tpu_custom_call.1} parent=0
    #allocation2 [shape = 'u8[2048]{0}', space=vmem, size = 0x800, scoped, tag = 'input window, operand 0, single buffered']
    #allocation3 [shape = 's32[1]{0}', space=sflag, size = 0x4, scoped, tag = 'scoped memory for tpu_custom_call.1']
    #allocation4 [shape = 's32[1]{0}', space=sflag, size = 0x4, scoped, tag = 'scoped memory for tpu_custom_call.1']
    #allocation5 [shape = 'u8[6144]{0}', space=vmem, size = 0x1800, scoped, tag = 'input window, operand 1, single buffered']
    #allocation6 [shape = 's32[1]{0}', space=sflag, size = 0x4, scoped, tag = 'scoped memory for tpu_custom_call.1']
    #allocation7 [shape = 'u8[6144]{0}', space=vmem, size = 0x1800, scoped, tag = 'input window, operand 2, single buffered']
    #allocation8 [shape = 'u8[24576]{0}', space=vmem, size = 0x6000, scoped, tag = 'input window, operand 3, single buffered']
    #allocation9 [shape = 's32[1]{0}', space=sflag, size = 0x4, scoped, tag = 'scoped memory for tpu_custom_call.1']
    #allocation10 [shape = 'u8[32768]{0}', space=vmem, size = 0x8000, scoped, tag = 'input window, operand 4, single buffered']
    #allocation11 [shape = 'u8[49152]{0}', space=vmem, size = 0xc000, scoped, tag = 'input window, operand 5, single buffered']
    #allocation12 [shape = 's32[1]{0}', space=sflag, size = 0x4, scoped, tag = 'scoped memory for tpu_custom_call.1']
    #allocation13 [shape = 'u8[12288]{0}', space=vmem, size = 0x3000, scoped, tag = 'output window, operand 0, single buffered']
    %12 = vsyncpa [#allocation3], 0
    %13 = vsyncpa [#allocation6], 0
    %14 = vsyncpa [#allocation9], 0
    %15 = vsyncpa [#allocation12], 0
    %16 = vsyncpa [#allocation4], 0
    // Predicated region
    $region2: #{tpu_custom_call.1} parent=1 // pred_check
      _
    $region3: #{tpu_custom_call.1} parent=1 // pred_check_branch
      %18 = sbr.rel (0) target = $region5
    $region4: #{tpu_custom_call.1} parent=1 // pred_region
      %s20 = ssub.s32 64, 64
      %21 = vsyncadd [#allocation3], %s20
      %s23 = sshll.u32 [#allocation2], 4
      %s24 = int_to_ptr.vmem [resolvable:$true] %s23
      %26 = dma.hbm_to_vmem [thread:$0]  %s0, 64, %s24, [#allocation3]
    $region5: #{tpu_custom_call.1} parent=1 // pred_fallthru
      _
    // Predicated region
    $region6: #{tpu_custom_call.1} parent=1 // pred_check
      _
    $region7: #{tpu_custom_call.1} parent=1 // pred_check_branch
      %28 = sbr.rel (0) target = $region9
    $region8: #{tpu_custom_call.1} parent=1 // pred_region
      %s30 = ssub.s32 192, 192
      %31 = vsyncadd [#allocation6], %s30
      %s32 = sshll.u32 [#allocation5], 4
      %s33 = int_to_ptr.vmem [resolvable:$true] %s32
      %38 = dma.hbm_to_vmem [thread:$0]  %s1, 192, %s33, [#allocation6], 64, 64, 4
    $region9: #{tpu_custom_call.1} parent=1 // pred_fallthru
      _
    // Predicated region
    $region10: #{tpu_custom_call.1} parent=1 // pred_check
      _
    $region11: #{tpu_custom_call.1} parent=1 // pred_check_branch
      %40 = sbr.rel (0) target = $region13
    $region12: #{tpu_custom_call.1} parent=1 // pred_region
      %s42 = ssub.s32 192, 192
      %43 = vsyncadd [#allocation6], %s42
      %s44 = sshll.u32 [#allocation7], 4
      %s45 = int_to_ptr.vmem [resolvable:$true] %s44
      %50 = dma.hbm_to_vmem [thread:$0]  %s2, 192, %s45, [#allocation6], 64, 64, 4
    $region13: #{tpu_custom_call.1} parent=1 // pred_fallthru
      _
    // Predicated region
    $region14: #{tpu_custom_call.1} parent=1 // pred_check
      _
    $region15: #{tpu_custom_call.1} parent=1 // pred_check_branch
      %52 = sbr.rel (0) target = $region17
    $region16: #{tpu_custom_call.1} parent=1 // pred_region
      %s54 = ssub.s32 768, 768
      %55 = vsyncadd [#allocation9], %s54
      %s56 = sshll.u32 [#allocation8], 4
      %s57 = int_to_ptr.vmem [resolvable:$true] %s56
      %62 = dma.hbm_to_vmem [thread:$0]  %s3, 768, %s57, [#allocation9], 128, 128, 8
    $region17: #{tpu_custom_call.1} parent=1 // pred_fallthru
      _
    // Predicated region
    $region18: #{tpu_custom_call.1} parent=1 // pred_check
      _
    $region19: #{tpu_custom_call.1} parent=1 // pred_check_branch
      %64 = sbr.rel (0) target = $region21
    $region20: #{tpu_custom_call.1} parent=1 // pred_region
      %s66 = ssub.s32 1024, 1024
      %67 = vsyncadd [#allocation9], %s66
      %s68 = sshll.u32 [#allocation10], 4
      %s69 = int_to_ptr.vmem [resolvable:$true] %s68
      %74 = dma.hbm_to_vmem [thread:$0]  %s4, 1024, %s69, [#allocation9], 128, 128, 8
    $region21: #{tpu_custom_call.1} parent=1 // pred_fallthru
      _
    // Predicated region
    $region22: #{tpu_custom_call.1} parent=1 // pred_check
      _
    $region23: #{tpu_custom_call.1} parent=1 // pred_check_branch
      %76 = sbr.rel (0) target = $region25
    $region24: #{tpu_custom_call.1} parent=1 // pred_region
      %s78 = ssub.s32 1536, 1536
      %79 = vsyncadd [#allocation12], %s78
      %s80 = sshll.u32 [#allocation11], 4
      %s81 = int_to_ptr.vmem [resolvable:$true] %s80
      %86 = dma.hbm_to_vmem [thread:$0]  %s5, 1536, %s81, [#allocation12], 128, 128, 8
    $region25: #{tpu_custom_call.1} parent=1 // pred_fallthru
      _
    // Predicated region
    $region26: #{tpu_custom_call.1} parent=1 // pred_check
      _
    $region27: #{tpu_custom_call.1} parent=1 // pred_check_branch
      %88 = sbr.rel (0) target = $region29
    $region28: #{tpu_custom_call.1} parent=1 // pred_region
      _
    $region29: #{tpu_custom_call.1} parent=1 // pred_fallthru
      _
    // Predicated region
    $region30: #{tpu_custom_call.1} parent=1 // pred_check
      _
    $region31: #{tpu_custom_call.1} parent=1 // pred_check_branch
      %90 = sbr.rel (0) target = $region33
    $region32: #{tpu_custom_call.1} parent=1 // pred_region
      %91 = dma.done [#allocation3], 64
    $region33: #{tpu_custom_call.1} parent=1 // pred_fallthru
      _
    // Predicated region
    $region34: #{tpu_custom_call.1} parent=1 // pred_check
      _
    $region35: #{tpu_custom_call.1} parent=1 // pred_check_branch
      %93 = sbr.rel (0) target = $region37
    $region36: #{tpu_custom_call.1} parent=1 // pred_region
      %94 = dma.done [#allocation6], 192
    $region37: #{tpu_custom_call.1} parent=1 // pred_fallthru
      _
    // Predicated region
    $region38: #{tpu_custom_call.1} parent=1 // pred_check
      _
    $region39: #{tpu_custom_call.1} parent=1 // pred_check_branch
      %96 = sbr.rel (0) target = $region41
    $region40: #{tpu_custom_call.1} parent=1 // pred_region
      %97 = dma.done [#allocation6], 192
    $region41: #{tpu_custom_call.1} parent=1 // pred_fallthru
      _
    // Predicated region
    $region42: #{tpu_custom_call.1} parent=1 // pred_check
      _
    $region43: #{tpu_custom_call.1} parent=1 // pred_check_branch
      %99 = sbr.rel (0) target = $region45
    $region44: #{tpu_custom_call.1} parent=1 // pred_region
      %100 = dma.done [#allocation9], 768
    $region45: #{tpu_custom_call.1} parent=1 // pred_fallthru
      _
    // Predicated region
    $region46: #{tpu_custom_call.1} parent=1 // pred_check
      _
    $region47: #{tpu_custom_call.1} parent=1 // pred_check_branch
      %102 = sbr.rel (0) target = $region49
    $region48: #{tpu_custom_call.1} parent=1 // pred_region
      %103 = dma.done [#allocation9], 1024
    $region49: #{tpu_custom_call.1} parent=1 // pred_fallthru
      _
    // Predicated region
    $region50: #{tpu_custom_call.1} parent=1 // pred_check
      _
    $region51: #{tpu_custom_call.1} parent=1 // pred_check_branch
      %105 = sbr.rel (0) target = $region53
    $region52: #{tpu_custom_call.1} parent=1 // pred_region
      %106 = dma.done [#allocation12], 1536
    $region53: #{tpu_custom_call.1} parent=1 // pred_fallthru
      _
    %v107 = vld [vmem:[#allocation2] sm:$0xf]
    %v108 = vld [vmem:[#allocation8] sm:$0xff]
    %v109 = vld [vmem:[#allocation8 + $0x8] sm:$0xff]
    %v110 = vld [vmem:[#allocation8 + $0x10] sm:$0xff]
    %v111 = vld [vmem:[#allocation8 + $0x18] sm:$0xff]
    %v112 = vld [vmem:[#allocation8 + $0x20] sm:$0xff]
    %v113 = vld [vmem:[#allocation8 + $0x28] sm:$0xff]
    %v114 = vld [vmem:[#allocation5] sm:$0xf]
    %v115 = vld [vmem:[#allocation11] sm:$0xff]
    %v116 = vld [vmem:[#allocation11 + $0x8] sm:$0xff]
    %v117 = vld [vmem:[#allocation11 + $0x10] sm:$0xff]
    %v118 = vld [vmem:[#allocation11 + $0x18] sm:$0xff]
    %vm119 = vcmask 261120
    %v121 = vsel %vm119, %v114, 0
    %123 = vmatprep.subr.mxu0 0.0
    %124 = vmatpush1.msra.mxu0 0.0
    %125 = vmatprep.subr.mxu0 0.0
    %126 = vmatpush1.msra.mxu0 0.0
    %127 = vmatprep.subr.mxu0 0.0
    %128 = vmatpush1.msra.mxu0 0.0
    %129 = vmatprep.subr.mxu0 0.0
    %130 = vmatpush1.msra.mxu0 0.0
    %131 = vmatprep.subr.mxu0 0.0
    %132 = vmatpush1.msra.mxu0 0.0
    %133 = vmatprep.subr.mxu0 0.0
    %134 = vmatpush1.msra.mxu0 0.0
    %135 = vmatprep.subr.mxu0 0.0
    %136 = vmatpush1.msra.mxu0 0.0
    %137 = vmatprep.subr.mxu0 0.0
    %138 = vmatpush1.msra.mxu0 0.0
    %139 = vmatprep.subr.mxu0 0.0
    %140 = vmatpush1.msra.mxu0 0.0
    %141 = vmatprep.subr.mxu0 0.0
    %142 = vmatpush1.msra.mxu0 0.0
    %143 = vmatprep.subr.mxu0 0.0
    %144 = vmatpush1.msra.mxu0 0.0
    %145 = vmatprep.subr.mxu0 0.0
    %146 = vmatpush1.msra.mxu0 0.0
    %147 = vmatprep.subr.mxu0 0.0
    %148 = vmatpush1.msra.mxu0 %v118
    %149 = vmatprep.subr.mxu0 0.0
    %150 = vmatpush1.msra.mxu0 %v117
    %151 = vmatprep.subr.mxu0 0.0
    %152 = vmatpush1.msra.mxu0 %v116
    %153 = vmatprep.subr.mxu0 0.0
    %154 = vmatpush1.msra.mxu0 %v115
    %155 = vmatprep.subr.mxu0 0.0
    %156 = vmatpush2.msra.mxu0 0.0
    %157 = vmatprep.subr.mxu0 0.0
    %158 = vmatpush2.msra.mxu0 0.0
    %159 = vmatprep.subr.mxu0 0.0
    %160 = vmatpush2.msra.mxu0 0.0
    %161 = vmatprep.subr.mxu0 0.0
    %162 = vmatpush2.msra.mxu0 0.0
    %163 = vmatprep.subr.mxu0 0.0
    %164 = vmatpush2.msra.mxu0 0.0
    %165 = vmatprep.subr.mxu0 0.0
    %166 = vmatpush2.msra.mxu0 0.0
    %167 = vmatprep.subr.mxu0 0.0
    %168 = vmatpush2.msra.mxu0 0.0
    %169 = vmatprep.subr.mxu0 0.0
    %170 = vmatpush2.msra.mxu0 0.0
    %171 = vmatprep.subr.mxu0 0.0
    %172 = vmatpush2.msra.mxu0 0.0
    %173 = vmatprep.subr.mxu0 0.0
    %174 = vmatpush2.msra.mxu0 0.0
    %175 = vmatprep.subr.mxu0 0.0
    %176 = vmatpush2.msra.mxu0 0.0
    %177 = vmatprep.subr.mxu0 0.0
    %178 = vmatpush2.msra.mxu0 0.0
    %179 = vmatprep.subr.mxu0 0.0
    %180 = vmatpush2.msra.mxu0 0.0
    %181 = vmatprep.subr.mxu0 0.0
    %182 = vmatpush2.msra.mxu0 0.0
    %183 = vmatprep.subr.mxu0 0.0
    %184 = vmatpush2.msra.mxu0 0.0
    %185 = vmatprep.subr.mxu0 0.0
    %186 = vmatpush2.msra.mxu0 0.0
    %187 = vmatprep.mubr.f32.mxu0 0.0
    %188 = vmatmul.mubr.f32.gmra.mxu0 %v121
    %v189 = vpop.f32.mrf.mxu0
    %v190 = vadd.f32 0.0, %v189
    %v191 = vpop.f32.mrf.mxu0
    %192 = vdwg.mxu0
    %vm193 = vcmask 392192
    %v195 = vsel %vm193, %v107, 0
    %197 = vmatprep.subr.mxu0 0.0
    %198 = vmatpush1.msra.mxu0 0.0
    %199 = vmatprep.subr.mxu0 0.0
    %200 = vmatpush1.msra.mxu0 0.0
    %201 = vmatprep.subr.mxu0 0.0
    %202 = vmatpush1.msra.mxu0 0.0
    %203 = vmatprep.subr.mxu0 0.0
    %204 = vmatpush1.msra.mxu0 0.0
    %205 = vmatprep.subr.mxu0 0.0
    %206 = vmatpush1.msra.mxu0 0.0
    %207 = vmatprep.subr.mxu0 0.0
    %208 = vmatpush1.msra.mxu0 0.0
    %209 = vmatprep.subr.mxu0 0.0
    %210 = vmatpush1.msra.mxu0 0.0
    %211 = vmatprep.subr.mxu0 0.0
    %212 = vmatpush1.msra.mxu0 0.0
    %213 = vmatprep.subr.mxu0 0.0
    %214 = vmatpush1.msra.mxu0 0.0
    %215 = vmatprep.subr.mxu0 0.0
    %216 = vmatpush1.msra.mxu0 0.0
    %217 = vmatprep.subr.mxu0 0.0
    %218 = vmatpush1.msra.mxu0 %v113
    %219 = vmatprep.subr.mxu0 0.0
    %220 = vmatpush1.msra.mxu0 %v112
    %221 = vmatprep.subr.mxu0 0.0
    %222 = vmatpush1.msra.mxu0 %v111
    %223 = vmatprep.subr.mxu0 0.0
    %224 = vmatpush1.msra.mxu0 %v110
    %225 = vmatprep.subr.mxu0 0.0
    %226 = vmatpush1.msra.mxu0 %v109
    %227 = vmatprep.subr.mxu0 0.0
    %228 = vmatpush1.msra.mxu0 %v108
    %229 = vmatprep.subr.mxu0 0.0
    %230 = vmatpush2.msra.mxu0 0.0
    %231 = vmatprep.subr.mxu0 0.0
    %232 = vmatpush2.msra.mxu0 0.0
    %233 = vmatprep.subr.mxu0 0.0
    %234 = vmatpush2.msra.mxu0 0.0
    %235 = vmatprep.subr.mxu0 0.0
    %236 = vmatpush2.msra.mxu0 0.0
    %237 = vmatprep.subr.mxu0 0.0
    %238 = vmatpush2.msra.mxu0 0.0
    %239 = vmatprep.subr.mxu0 0.0
    %240 = vmatpush2.msra.mxu0 0.0
    %241 = vmatprep.subr.mxu0 0.0
    %242 = vmatpush2.msra.mxu0 0.0
    %243 = vmatprep.subr.mxu0 0.0
    %244 = vmatpush2.msra.mxu0 0.0
    %245 = vmatprep.subr.mxu0 0.0
    %246 = vmatpush2.msra.mxu0 0.0
    %247 = vmatprep.subr.mxu0 0.0
    %248 = vmatpush2.msra.mxu0 0.0
    %249 = vmatprep.subr.mxu0 0.0
    %250 = vmatpush2.msra.mxu0 0.0
    %251 = vmatprep.subr.mxu0 0.0
    %252 = vmatpush2.msra.mxu0 0.0
    %253 = vmatprep.subr.mxu0 0.0
    %254 = vmatpush2.msra.mxu0 0.0
    %255 = vmatprep.subr.mxu0 0.0
    %256 = vmatpush2.msra.mxu0 0.0
    %257 = vmatprep.subr.mxu0 0.0
    %258 = vmatpush2.msra.mxu0 0.0
    %259 = vmatprep.subr.mxu0 0.0
    %260 = vmatpush2.msra.mxu0 0.0
    %261 = vmatprep.mubr.f32.mxu0 0.0
    %262 = vmatmul.mubr.f32.gmra.mxu0 %v195
    %v263 = vpop.f32.mrf.mxu0
    %v264 = vadd.f32 %v190, %v263
    %v265 = vpop.f32.mrf.mxu0
    %266 = vdwg.mxu0
    %v267 = vld [vmem:[%s6] sm:$0x1]
    %v269 = vlaneseq
    %v270 = vshrl.u32 %v269, 7
    %v271 = vsub.s32 0, %v270
    %v272 = vrot.slane %v267, %v271
    %v274 = vadd.f32 %v264, %v272
    %v275 = vlaneseq
    %v276 = vand.u32 %v275, 127
    %vm277 = vcmp.ge.s32.totalorder %v276, 64
    %vm278 = vcmp.lt.s32.totalorder %v276, 96
    %vm279 = vmand %vm277, %vm278
    %v280 = vtanh.pop %v274
    %v281 = vxor.u32 %v274, 2147483648
    %v282 = vmul.f32 %v281, 1.442695
    %v283 = vpow.pop %v282
    %v284 = vadd.f32 %v283, 1.0
    %v285 = vrcp.pop %v284
    %v286 = vmul.f32 1.0, %v285
    %v287 = vsel %vm279, %v280, %v286
    %v288 = vld [vmem:[#allocation7] sm:$0xf]
    %290 = vrot.lane.b32.xlu0 %v288, 32
    %v291 = vpop.permute.xlu0 %290
    %v293 = vmul.f32 %v287, %v291
    %295 = vrot.lane.b32.xlu0 %v287, 64
    %v296 = vpop.permute.xlu0 %295
    %v298 = vmul.f32 %v287, %v296
    %300 = vrot.lane.b32.xlu0 %v298, 32
    %v301 = vpop.permute.xlu0 %300
    %v303 = vadd.f32 %v293, %v301
    %v304 = vtanh.pop %v303
    %306 = vrot.lane.b32.xlu0 %v304, 64
    %v307 = vpop.permute.xlu0 %306
    %v309 = vmul.f32 %v287, %v307
    %311 = vrot.lane.b32.xlu0 %v309, 32
    %v312 = vpop.permute.xlu0 %311
    %vm314 = vcmask 257024
    %315 = vst.msk [vmem:[#allocation13] sm:$0xf] %vm314, %v312
    %317 = vrot.lane.b32.xlu0 %v303, 96
    %v318 = vpop.permute.xlu0 %317
    %s320 = scalar_lea.vmem [#allocation13], 4
    %321 = vst.msk [vmem:[%s320] sm:$0xf] %vm314, %v318
    %v322 = vld [vmem:[#allocation10] sm:$0xff]
    %v323 = vld [vmem:[#allocation10 + $0x8] sm:$0xff]
    %v324 = vld [vmem:[#allocation10 + $0x10] sm:$0xff]
    %v325 = vld [vmem:[#allocation10 + $0x18] sm:$0xff]
    %s326 = scalar_lea.vmem [#allocation5], 4
    %v327 = vld [vmem:[%s326] sm:$0xf]
    %s328 = scalar_lea.vmem [#allocation11], 32
    %v329 = vld [vmem:[%s328] sm:$0xff]
    %v330 = vld [vmem:[%s328 + $0x8] sm:$0xff]
    %v331 = vld [vmem:[%s328 + $0x10] sm:$0xff]
    %v332 = vld [vmem:[%s328 + $0x18] sm:$0xff]
    %v334 = vsel %vm119, %v327, 0
    %336 = vmatprep.subr.mxu0 0.0
    %337 = vmatpush1.msra.mxu0 0.0
    %338 = vmatprep.subr.mxu0 0.0
    %339 = vmatpush1.msra.mxu0 0.0
    %340 = vmatprep.subr.mxu0 0.0
    %341 = vmatpush1.msra.mxu0 0.0
    %342 = vmatprep.subr.mxu0 0.0
    %343 = vmatpush1.msra.mxu0 0.0
    %344 = vmatprep.subr.mxu0 0.0
    %345 = vmatpush1.msra.mxu0 0.0
    %346 = vmatprep.subr.mxu0 0.0
    %347 = vmatpush1.msra.mxu0 0.0
    %348 = vmatprep.subr.mxu0 0.0
    %349 = vmatpush1.msra.mxu0 0.0
    %350 = vmatprep.subr.mxu0 0.0
    %351 = vmatpush1.msra.mxu0 0.0
    %352 = vmatprep.subr.mxu0 0.0
    %353 = vmatpush1.msra.mxu0 0.0
    %354 = vmatprep.subr.mxu0 0.0
    %355 = vmatpush1.msra.mxu0 0.0
    %356 = vmatprep.subr.mxu0 0.0
    %357 = vmatpush1.msra.mxu0 0.0
    %358 = vmatprep.subr.mxu0 0.0
    %359 = vmatpush1.msra.mxu0 0.0
    %360 = vmatprep.subr.mxu0 0.0
    %361 = vmatpush1.msra.mxu0 %v332
    %362 = vmatprep.subr.mxu0 0.0
    %363 = vmatpush1.msra.mxu0 %v331
    %364 = vmatprep.subr.mxu0 0.0
    %365 = vmatpush1.msra.mxu0 %v330
    %366 = vmatprep.subr.mxu0 0.0
    %367 = vmatpush1.msra.mxu0 %v329
    %368 = vmatprep.subr.mxu0 0.0
    %369 = vmatpush2.msra.mxu0 0.0
    %370 = vmatprep.subr.mxu0 0.0
    %371 = vmatpush2.msra.mxu0 0.0
    %372 = vmatprep.subr.mxu0 0.0
    %373 = vmatpush2.msra.mxu0 0.0
    %374 = vmatprep.subr.mxu0 0.0
    %375 = vmatpush2.msra.mxu0 0.0
    %376 = vmatprep.subr.mxu0 0.0
    %377 = vmatpush2.msra.mxu0 0.0
    %378 = vmatprep.subr.mxu0 0.0
    %379 = vmatpush2.msra.mxu0 0.0
    %380 = vmatprep.subr.mxu0 0.0
    %381 = vmatpush2.msra.mxu0 0.0
    %382 = vmatprep.subr.mxu0 0.0
    %383 = vmatpush2.msra.mxu0 0.0
    %384 = vmatprep.subr.mxu0 0.0
    %385 = vmatpush2.msra.mxu0 0.0
    %386 = vmatprep.subr.mxu0 0.0
    %387 = vmatpush2.msra.mxu0 0.0
    %388 = vmatprep.subr.mxu0 0.0
    %389 = vmatpush2.msra.mxu0 0.0
    %390 = vmatprep.subr.mxu0 0.0
    %391 = vmatpush2.msra.mxu0 0.0
    %392 = vmatprep.subr.mxu0 0.0
    %393 = vmatpush2.msra.mxu0 0.0
    %394 = vmatprep.subr.mxu0 0.0
    %395 = vmatpush2.msra.mxu0 0.0
    %396 = vmatprep.subr.mxu0 0.0
    %397 = vmatpush2.msra.mxu0 0.0
    %398 = vmatprep.subr.mxu0 0.0
    %399 = vmatpush2.msra.mxu0 0.0
    %400 = vmatprep.mubr.f32.mxu0 0.0
    %401 = vmatmul.mubr.f32.gmra.mxu0 %v334
    %v402 = vpop.f32.mrf.mxu0
    %v403 = vadd.f32 0.0, %v402
    %v404 = vpop.f32.mrf.mxu0
    %405 = vdwg.mxu0
    %v406 = vsel %vm119, %v312, 0
    %408 = vmatprep.subr.mxu0 0.0
    %409 = vmatpush1.msra.mxu0 0.0
    %410 = vmatprep.subr.mxu0 0.0
    %411 = vmatpush1.msra.mxu0 0.0
    %412 = vmatprep.subr.mxu0 0.0
    %413 = vmatpush1.msra.mxu0 0.0
    %414 = vmatprep.subr.mxu0 0.0
    %415 = vmatpush1.msra.mxu0 0.0
    %416 = vmatprep.subr.mxu0 0.0
    %417 = vmatpush1.msra.mxu0 0.0
    %418 = vmatprep.subr.mxu0 0.0
    %419 = vmatpush1.msra.mxu0 0.0
    %420 = vmatprep.subr.mxu0 0.0
    %421 = vmatpush1.msra.mxu0 0.0
    %422 = vmatprep.subr.mxu0 0.0
    %423 = vmatpush1.msra.mxu0 0.0
    %424 = vmatprep.subr.mxu0 0.0
    %425 = vmatpush1.msra.mxu0 0.0
    %426 = vmatprep.subr.mxu0 0.0
    %427 = vmatpush1.msra.mxu0 0.0
    %428 = vmatprep.subr.mxu0 0.0
    %429 = vmatpush1.msra.mxu0 0.0
    %430 = vmatprep.subr.mxu0 0.0
    %431 = vmatpush1.msra.mxu0 0.0
    %432 = vmatprep.subr.mxu0 0.0
    %433 = vmatpush1.msra.mxu0 %v325
    %434 = vmatprep.subr.mxu0 0.0
    %435 = vmatpush1.msra.mxu0 %v324
    %436 = vmatprep.subr.mxu0 0.0
    %437 = vmatpush1.msra.mxu0 %v323
    %438 = vmatprep.subr.mxu0 0.0
    %439 = vmatpush1.msra.mxu0 %v322
    %440 = vmatprep.subr.mxu0 0.0
    %441 = vmatpush2.msra.mxu0 0.0
    %442 = vmatprep.subr.mxu0 0.0
    %443 = vmatpush2.msra.mxu0 0.0
    %444 = vmatprep.subr.mxu0 0.0
    %445 = vmatpush2.msra.mxu0 0.0
    %446 = vmatprep.subr.mxu0 0.0
    %447 = vmatpush2.msra.mxu0 0.0
    %448 = vmatprep.subr.mxu0 0.0
    %449 = vmatpush2.msra.mxu0 0.0
    %450 = vmatprep.subr.mxu0 0.0
    %451 = vmatpush2.msra.mxu0 0.0
    %452 = vmatprep.subr.mxu0 0.0
    %453 = vmatpush2.msra.mxu0 0.0
    %454 = vmatprep.subr.mxu0 0.0
    %455 = vmatpush2.msra.mxu0 0.0
    %456 = vmatprep.subr.mxu0 0.0
    %457 = vmatpush2.msra.mxu0 0.0
    %458 = vmatprep.subr.mxu0 0.0
    %459 = vmatpush2.msra.mxu0 0.0
    %460 = vmatprep.subr.mxu0 0.0
    %461 = vmatpush2.msra.mxu0 0.0
    %462 = vmatprep.subr.mxu0 0.0
    %463 = vmatpush2.msra.mxu0 0.0
    %464 = vmatprep.subr.mxu0 0.0
    %465 = vmatpush2.msra.mxu0 0.0
    %466 = vmatprep.subr.mxu0 0.0
    %467 = vmatpush2.msra.mxu0 0.0
    %468 = vmatprep.subr.mxu0 0.0
    %469 = vmatpush2.msra.mxu0 0.0
    %470 = vmatprep.subr.mxu0 0.0
    %471 = vmatpush2.msra.mxu0 0.0
    %472 = vmatprep.mubr.f32.mxu0 0.0
    %473 = vmatmul.mubr.f32.gmra.mxu0 %v406
    %v474 = vpop.f32.mrf.mxu0
    %v475 = vadd.f32 %v403, %v474
    %v476 = vpop.f32.mrf.mxu0
    %477 = vdwg.mxu0
    %s478 = scalar_lea.vmem %s6, 1
    %v479 = vld [vmem:[%s478] sm:$0x1]
    %v481 = vlaneseq
    %v482 = vshrl.u32 %v481, 7
    %v483 = vsub.s32 0, %v482
    %v484 = vrot.slane %v479, %v483
    %v486 = vadd.f32 %v475, %v484
    %v487 = vtanh.pop %v486
    %v488 = vxor.u32 %v486, 2147483648
    %v489 = vmul.f32 %v488, 1.442695
    %v490 = vpow.pop %v489
    %v491 = vadd.f32 %v490, 1.0
    %v492 = vrcp.pop %v491
    %v493 = vmul.f32 1.0, %v492
    %v494 = vsel %vm279, %v487, %v493
    %s495 = scalar_lea.vmem [#allocation7], 4
    %v496 = vld [vmem:[%s495] sm:$0xf]
    %498 = vrot.lane.b32.xlu0 %v496, 32
    %v499 = vpop.permute.xlu0 %498
    %v501 = vmul.f32 %v494, %v499
    %503 = vrot.lane.b32.xlu0 %v494, 64
    %v504 = vpop.permute.xlu0 %503
    %v506 = vmul.f32 %v494, %v504
    %508 = vrot.lane.b32.xlu0 %v506, 32
    %v509 = vpop.permute.xlu0 %508
    %v511 = vadd.f32 %v501, %v509
    %v512 = vtanh.pop %v511
    %514 = vrot.lane.b32.xlu0 %v512, 64
    %v515 = vpop.permute.xlu0 %514
    %v517 = vmul.f32 %v494, %v515
    %519 = vrot.lane.b32.xlu0 %v517, 32
    %v520 = vpop.permute.xlu0 %519
    %s522 = scalar_lea.vmem [#allocation13], 8
    %523 = vst.msk [vmem:[%s522] sm:$0xf] %vm314, %v520
    %525 = vrot.lane.b32.xlu0 %v511, 96
    %v526 = vpop.permute.xlu0 %525
    %s528 = scalar_lea.vmem [#allocation13], 12
    %529 = vst.msk [vmem:[%s528] sm:$0xf] %vm314, %v526
    %s530 = scalar_lea.vmem [#allocation10], 32
    %v531 = vld [vmem:[%s530] sm:$0xff]
    %v532 = vld [vmem:[%s530 + $0x8] sm:$0xff]
    %v533 = vld [vmem:[%s530 + $0x10] sm:$0xff]
    %v534 = vld [vmem:[%s530 + $0x18] sm:$0xff]
    %s535 = scalar_lea.vmem [#allocation5], 8
    %v536 = vld [vmem:[%s535] sm:$0xf]
    %s537 = scalar_lea.vmem [#allocation11], 64
    %v538 = vld [vmem:[%s537] sm:$0xff]
    %v539 = vld [vmem:[%s537 + $0x8] sm:$0xff]
    %v540 = vld [vmem:[%s537 + $0x10] sm:$0xff]
    %v541 = vld [vmem:[%s537 + $0x18] sm:$0xff]
    %v543 = vsel %vm119, %v536, 0
    %545 = vmatprep.subr.mxu0 0.0
    %546 = vmatpush1.msra.mxu0 0.0
    %547 = vmatprep.subr.mxu0 0.0
    %548 = vmatpush1.msra.mxu0 0.0
    %549 = vmatprep.subr.mxu0 0.0
    %550 = vmatpush1.msra.mxu0 0.0
    %551 = vmatprep.subr.mxu0 0.0
    %552 = vmatpush1.msra.mxu0 0.0
    %553 = vmatprep.subr.mxu0 0.0
    %554 = vmatpush1.msra.mxu0 0.0
    %555 = vmatprep.subr.mxu0 0.0
    %556 = vmatpush1.msra.mxu0 0.0
    %557 = vmatprep.subr.mxu0 0.0
    %558 = vmatpush1.msra.mxu0 0.0
    %559 = vmatprep.subr.mxu0 0.0
    %560 = vmatpush1.msra.mxu0 0.0
    %561 = vmatprep.subr.mxu0 0.0
    %562 = vmatpush1.msra.mxu0 0.0
    %563 = vmatprep.subr.mxu0 0.0
    %564 = vmatpush1.msra.mxu0 0.0
    %565 = vmatprep.subr.mxu0 0.0
    %566 = vmatpush1.msra.mxu0 0.0
    %567 = vmatprep.subr.mxu0 0.0
    %568 = vmatpush1.msra.mxu0 0.0
    %569 = vmatprep.subr.mxu0 0.0
    %570 = vmatpush1.msra.mxu0 %v541
    %571 = vmatprep.subr.mxu0 0.0
    %572 = vmatpush1.msra.mxu0 %v540
    %573 = vmatprep.subr.mxu0 0.0
    %574 = vmatpush1.msra.mxu0 %v539
    %575 = vmatprep.subr.mxu0 0.0
    %576 = vmatpush1.msra.mxu0 %v538
    %577 = vmatprep.subr.mxu0 0.0
    %578 = vmatpush2.msra.mxu0 0.0
    %579 = vmatprep.subr.mxu0 0.0
    %580 = vmatpush2.msra.mxu0 0.0
    %581 = vmatprep.subr.mxu0 0.0
    %582 = vmatpush2.msra.mxu0 0.0
    %583 = vmatprep.subr.mxu0 0.0
    %584 = vmatpush2.msra.mxu0 0.0
    %585 = vmatprep.subr.mxu0 0.0
    %586 = vmatpush2.msra.mxu0 0.0
    %587 = vmatprep.subr.mxu0 0.0
    %588 = vmatpush2.msra.mxu0 0.0
    %589 = vmatprep.subr.mxu0 0.0
    %590 = vmatpush2.msra.mxu0 0.0
    %591 = vmatprep.subr.mxu0 0.0
    %592 = vmatpush2.msra.mxu0 0.0
    %593 = vmatprep.subr.mxu0 0.0
    %594 = vmatpush2.msra.mxu0 0.0
    %595 = vmatprep.subr.mxu0 0.0
    %596 = vmatpush2.msra.mxu0 0.0
    %597 = vmatprep.subr.mxu0 0.0
    %598 = vmatpush2.msra.mxu0 0.0
    %599 = vmatprep.subr.mxu0 0.0
    %600 = vmatpush2.msra.mxu0 0.0
    %601 = vmatprep.subr.mxu0 0.0
    %602 = vmatpush2.msra.mxu0 0.0
    %603 = vmatprep.subr.mxu0 0.0
    %604 = vmatpush2.msra.mxu0 0.0
    %605 = vmatprep.subr.mxu0 0.0
    %606 = vmatpush2.msra.mxu0 0.0
    %607 = vmatprep.subr.mxu0 0.0
    %608 = vmatpush2.msra.mxu0 0.0
    %609 = vmatprep.mubr.f32.mxu0 0.0
    %610 = vmatmul.mubr.f32.gmra.mxu0 %v543
    %v611 = vpop.f32.mrf.mxu0
    %v612 = vadd.f32 0.0, %v611
    %v613 = vpop.f32.mrf.mxu0
    %614 = vdwg.mxu0
    %v615 = vsel %vm119, %v520, 0
    %617 = vmatprep.subr.mxu0 0.0
    %618 = vmatpush1.msra.mxu0 0.0
    %619 = vmatprep.subr.mxu0 0.0
    %620 = vmatpush1.msra.mxu0 0.0
    %621 = vmatprep.subr.mxu0 0.0
    %622 = vmatpush1.msra.mxu0 0.0
    %623 = vmatprep.subr.mxu0 0.0
    %624 = vmatpush1.msra.mxu0 0.0
    %625 = vmatprep.subr.mxu0 0.0
    %626 = vmatpush1.msra.mxu0 0.0
    %627 = vmatprep.subr.mxu0 0.0
    %628 = vmatpush1.msra.mxu0 0.0
    %629 = vmatprep.subr.mxu0 0.0
    %630 = vmatpush1.msra.mxu0 0.0
    %631 = vmatprep.subr.mxu0 0.0
    %632 = vmatpush1.msra.mxu0 0.0
    %633 = vmatprep.subr.mxu0 0.0
    %634 = vmatpush1.msra.mxu0 0.0
    %635 = vmatprep.subr.mxu0 0.0
    %636 = vmatpush1.msra.mxu0 0.0
    %637 = vmatprep.subr.mxu0 0.0
    %638 = vmatpush1.msra.mxu0 0.0
    %639 = vmatprep.subr.mxu0 0.0
    %640 = vmatpush1.msra.mxu0 0.0
    %641 = vmatprep.subr.mxu0 0.0
    %642 = vmatpush1.msra.mxu0 %v534
    %643 = vmatprep.subr.mxu0 0.0
    %644 = vmatpush1.msra.mxu0 %v533
    %645 = vmatprep.subr.mxu0 0.0
    %646 = vmatpush1.msra.mxu0 %v532
    %647 = vmatprep.subr.mxu0 0.0
    %648 = vmatpush1.msra.mxu0 %v531
    %649 = vmatprep.subr.mxu0 0.0
    %650 = vmatpush2.msra.mxu0 0.0
    %651 = vmatprep.subr.mxu0 0.0
    %652 = vmatpush2.msra.mxu0 0.0
    %653 = vmatprep.subr.mxu0 0.0
    %654 = vmatpush2.msra.mxu0 0.0
    %655 = vmatprep.subr.mxu0 0.0
    %656 = vmatpush2.msra.mxu0 0.0
    %657 = vmatprep.subr.mxu0 0.0
    %658 = vmatpush2.msra.mxu0 0.0
    %659 = vmatprep.subr.mxu0 0.0
    %660 = vmatpush2.msra.mxu0 0.0
    %661 = vmatprep.subr.mxu0 0.0
    %662 = vmatpush2.msra.mxu0 0.0
    %663 = vmatprep.subr.mxu0 0.0
    %664 = vmatpush2.msra.mxu0 0.0
    %665 = vmatprep.subr.mxu0 0.0
    %666 = vmatpush2.msra.mxu0 0.0
    %667 = vmatprep.subr.mxu0 0.0
    %668 = vmatpush2.msra.mxu0 0.0
    %669 = vmatprep.subr.mxu0 0.0
    %670 = vmatpush2.msra.mxu0 0.0
    %671 = vmatprep.subr.mxu0 0.0
    %672 = vmatpush2.msra.mxu0 0.0
    %673 = vmatprep.subr.mxu0 0.0
    %674 = vmatpush2.msra.mxu0 0.0
    %675 = vmatprep.subr.mxu0 0.0
    %676 = vmatpush2.msra.mxu0 0.0
    %677 = vmatprep.subr.mxu0 0.0
    %678 = vmatpush2.msra.mxu0 0.0
    %679 = vmatprep.subr.mxu0 0.0
    %680 = vmatpush2.msra.mxu0 0.0
    %681 = vmatprep.mubr.f32.mxu0 0.0
    %682 = vmatmul.mubr.f32.gmra.mxu0 %v615
    %v683 = vpop.f32.mrf.mxu0
    %v684 = vadd.f32 %v612, %v683
    %v685 = vpop.f32.mrf.mxu0
    %686 = vdwg.mxu0
    %s687 = scalar_lea.vmem %s6, 2
    %v688 = vld [vmem:[%s687] sm:$0x1]
    %v690 = vlaneseq
    %v691 = vshrl.u32 %v690, 7
    %v692 = vsub.s32 0, %v691
    %v693 = vrot.slane %v688, %v692
    %v695 = vadd.f32 %v684, %v693
    %v696 = vtanh.pop %v695
    %v697 = vxor.u32 %v695, 2147483648
    %v698 = vmul.f32 %v697, 1.442695
    %v699 = vpow.pop %v698
    %v700 = vadd.f32 %v699, 1.0
    %v701 = vrcp.pop %v700
    %v702 = vmul.f32 1.0, %v701
    %v703 = vsel %vm279, %v696, %v702
    %s704 = scalar_lea.vmem [#allocation7], 8
    %v705 = vld [vmem:[%s704] sm:$0xf]
    %707 = vrot.lane.b32.xlu0 %v705, 32
    %v708 = vpop.permute.xlu0 %707
    %v710 = vmul.f32 %v703, %v708
    %712 = vrot.lane.b32.xlu0 %v703, 64
    %v713 = vpop.permute.xlu0 %712
    %v715 = vmul.f32 %v703, %v713
    %717 = vrot.lane.b32.xlu0 %v715, 32
    %v718 = vpop.permute.xlu0 %717
    %v720 = vadd.f32 %v710, %v718
    %v721 = vtanh.pop %v720
    %723 = vrot.lane.b32.xlu0 %v721, 64
    %v724 = vpop.permute.xlu0 %723
    %v726 = vmul.f32 %v703, %v724
    %728 = vrot.lane.b32.xlu0 %v726, 32
    %v729 = vpop.permute.xlu0 %728
    %s731 = scalar_lea.vmem [#allocation13], 16
    %732 = vst.msk [vmem:[%s731] sm:$0xf] %vm314, %v729
    %734 = vrot.lane.b32.xlu0 %v720, 96
    %v735 = vpop.permute.xlu0 %734
    %s737 = scalar_lea.vmem [#allocation13], 20
    %738 = vst.msk [vmem:[%s737] sm:$0xf] %vm314, %v735
    // Predicated region
    $region54: #{tpu_custom_call.1} parent=1 // pred_check
      _
    $region55: #{tpu_custom_call.1} parent=1 // pred_check_branch
      %740 = sbr.rel (0) target = $region57
    $region56: #{tpu_custom_call.1} parent=1 // pred_region
      %s742 = ssub.s32 384, 384
      %743 = vsyncadd [#allocation4], %s742
      %s744 = sshll.u32 [#allocation13], 4
      %s745 = int_to_ptr.vmem [resolvable:$true] %s744
      %750 = dma.vmem_to_hbm [thread:$0]  %s745, 384, %s7, [#allocation4], 64, 64, 4
    $region57: #{tpu_custom_call.1} parent=1 // pred_fallthru
      _
    // Predicated region
    $region58: #{tpu_custom_call.1} parent=1 // pred_check
      _
    $region59: #{tpu_custom_call.1} parent=1 // pred_check_branch
      %752 = sbr.rel (0) target = $region61
    $region60: #{tpu_custom_call.1} parent=1 // pred_region
      %753 = dma.done [#allocation4], 384
    $region61: #{tpu_custom_call.1} parent=1 // pred_fallthru
      _
    %754 = vsyncpa [#allocation3], 1
    %755 = vsyncpa [#allocation6], 1
    %756 = vsyncpa [#allocation9], 1
    %757 = vsyncpa [#allocation12], 1
    %758 = vsyncpa [#allocation4], 1

</llo_original>
